<compile_context>
chip_gen: v7x
topology: tpu7x:2x2x1
jax: 0.10.0
libtpu: 0.0.40
codegen_flags: <defaults>
</compile_context>

<pallas_src>
import jax
import jax.numpy as jnp
from jax.experimental import pallas as pl
from jax.experimental.pallas import tpu as pltpu


def _cdiv(a, b):
    return (a + b - 1) // b


def _round_up(x, m):
    return _cdiv(x, m) * m


# ---------------------------------------------------------------------------
# Kernels
# ---------------------------------------------------------------------------
def _clm_head_kernel_2d(x_ref, w_ref, b_ref, o_ref):
    """Full-H reduction in one step: (tm, H) x (tn, H)^T -> (tm, tn), bias fused."""
    acc = jax.lax.dot_general(
        x_ref[...], w_ref[...],
        dimension_numbers=(((1,), (1,)), ((), ())),   # contract H on both (no W.T copy)
        preferred_element_type=jnp.float32,
    )
    o_ref[...] = (acc + b_ref[...]).astype(o_ref.dtype)


def _clm_head_kernel_3d(x_ref, w_ref, b_ref, o_ref, acc_ref):
    """Tiled reduction over H (k innermost); f32 accumulator resident in VMEM."""
    k = pl.program_id(2)

    @pl.when(k == 0)
    def _():
        acc_ref[...] = jnp.zeros_like(acc_ref)

    acc_ref[...] += jax.lax.dot_general(
        x_ref[...], w_ref[...],
        dimension_numbers=(((1,), (1,)), ((), ())),
        preferred_element_type=jnp.float32,
    )

    @pl.when(k == pl.num_programs(2) - 1)
    def _():
        o_ref[...] = (acc_ref[...] + b_ref[...]).astype(o_ref.dtype)


# ---------------------------------------------------------------------------
# VMEM footprint estimates (double-buffered tiles; conservative)
# ---------------------------------------------------------------------------
def _vmem_need_2d(tm, tn, h, xb, wb, ob, bb):
    return 2 * (tm * h * xb + tn * h * wb + tm * tn * ob + tn * bb)


def _vmem_need_3d(tm, tn, tk, xb, wb, ob, bb):
    return 2 * (tm * tk * xb + tn * tk * wb + tm * tn * ob + tn * bb) + tm * tn * 4


# ---------------------------------------------------------------------------
# Tile / budget helpers
# ---------------------------------------------------------------------------
def _vmem_capacity_bytes():
    cap = 64 * 1024 * 1024  # conservative fallback (v7x per-TC physical VMEM)
    try:
        info = pltpu.get_tpu_info()
        cap = int(getattr(info, "vmem_capacity_bytes", cap))
    except Exception:
        pass
    return cap


def _clamp_tile(target, full, granule):
    """Largest legal tile <= target: full dim if it fits, else a granule multiple."""
    if full <= target:
        return full                       # block == full array dim is always legal
    return max(granule, (target // granule) * granule)


def _half_tile(t, granule):
    if t <= granule:
        return t
    return max(granule, ((t // 2) // granule) * granule)


def _shrink_to_fit(fits, tm, tn):
    """Greedy halving (larger tile first) until `fits(tm, tn)` or floors reached."""
    while not fits(tm, tn):
        if tm >= tn and tm > 8:
            tm = _half_tile(tm, 8)
        elif tn > 128:
            tn = _half_tile(tn, 128)
        elif tm > 8:
            tm = _half_tile(tm, 8)
        else:
            return tm, tn, False
    return tm, tn, True


# ---------------------------------------------------------------------------
# Wrapper
# ---------------------------------------------------------------------------
def cocolm_clm_head(hidden_states, weight, bias, *,
                    tm=1024, tn=512, tk=None,
                    compute_dtype=None,
                    vmem_budget_bytes=None):
    """hidden_states: (B, S, H); weight: (V, H); bias: (V,). Returns (B, S, V)."""
    out_dtype = hidden_states.dtype
    B, S, H = hidden_states.shape
    V, H_w = weight.shape
    assert H_w == H, "weight must be (vocab_size, hidden_size)"
    M = B * S

    # Dtype policy: the weight is used in the dtype the caller stores it in (store it
    # in bf16 to halve HBM traffic).  Only the small activations are cast to match.
    if compute_dtype is not None and weight.dtype != jnp.dtype(compute_dtype):
        # NOTE: this re-reads/re-writes the full V*H weight through HBM every call.
        # Prefer storing the LM-head weight in `compute_dtype` at the caller.
        weight = weight.astype(compute_dtype)
    if hidden_states.dtype != weight.dtype:
        hidden_states = hidden_states.astype(weight.dtype)   # cheap: only M*H bytes

    xb = hidden_states.dtype.itemsize
    wb = weight.dtype.itemsize
    ob = jnp.dtype(out_dtype).itemsize
    bb = bias.dtype.itemsize

    cap = _vmem_capacity_bytes()
    budget = int(vmem_budget_bytes) if vmem_budget_bytes is not None else (cap * 3) // 4

    tm_t = _clamp_tile(int(tm), M, 8)
    tn_t = _clamp_tile(int(tn), V, 128)

    # ----- reduction strategy -------------------------------------------------
    if tk is not None:
        tk_sel = max(128, (int(tk) // 128) * 128)
        forced_3d = tk_sel < H
    else:
        tk_sel = None
        forced_3d = False

    if forced_3d:
        single_k = False
        tm_s, tn_s, _ = _shrink_to_fit(
            lambda a, b: _vmem_need_3d(a, b, tk_sel, xb, wb, ob, bb) <= budget,
            tm_t, tn_t)
    else:
        fits2 = lambda a, b: _vmem_need_2d(a, b, H, xb, wb, ob, bb) <= budget
        tm_s, tn_s, ok = _shrink_to_fit(fits2, tm_t, tn_t)
        single_k = ok
        tk_sel = H
        if not ok:
            # Tiled-K fallback (very large H): restart from the large tile targets.
            tm_s, tn_s = tm_t, tn_t
            tk_sel = None
            for cand in (2048, 1024, 512, 256, 128):       # prefer exact divisors of H
                if cand < H and H % cand == 0 and \
                        _vmem_need_3d(tm_s, tn_s, cand, xb, wb, ob, bb) <= budget:
                    tk_sel = cand
                    break
            if tk_sel is None:
                for cand in (2048, 1024, 512, 256, 128):
                    if cand < H and _vmem_need_3d(tm_s, tn_s, cand, xb, wb, ob, bb) <= budget:
                        tk_sel = cand
                        break
            if tk_sel is None:
                tk_sel = 128
                tm_s, tn_s, _ = _shrink_to_fit(
                    lambda a, b: _vmem_need_3d(a, b, tk_sel, xb, wb, ob, bb) <= budget,
                    tm_s, tn_s)

    tm_sel, tn_sel = tm_s, tn_s

    # ----- operands (no M/V padding; ragged edges handled by Pallas masking) ---
    x2d = hidden_states.reshape(M, H)
    w = weight
    b2d = bias.reshape(1, V)

    H_eff = H
    if (not single_k) and (H % tk_sel != 0):
        # Zero-padding the reduction dim is exact but costs a weight re-write;
        # it only triggers for a ragged H with the tiled-K fallback (rare).
        H_eff = _round_up(H, tk_sel)
        x2d = jnp.pad(x2d, ((0, 0), (0, H_eff - H)))
        w = jnp.pad(w, ((0, 0), (0, H_eff - H)))

    gm = _cdiv(M, tm_sel)
    gn = _cdiv(V, tn_sel)

    if single_k:
        # Choose the sweep order that minimizes re-streamed HBM bytes:
        #   rows-inner  (vocab outer): weight read exactly once, X re-read gn times
        #   vocab-inner (rows outer) : X read exactly once, weight re-read gm times
        rows_inner = (gn * M * H_eff * xb + V * H_eff * wb) <= \
                     (gm * V * H_eff * wb + M * H_eff * xb)
        if rows_inner:
            grid = (gn, gm)
            in_specs = [
                pl.BlockSpec((tm_sel, H_eff), lambda n, m: (m, 0)),
                pl.BlockSpec((tn_sel, H_eff), lambda n, m: (n, 0)),  # constant over inner sweep
                pl.BlockSpec((1, tn_sel), lambda n, m: (0, n)),
            ]
            out_specs = pl.BlockSpec((tm_sel, tn_sel), lambda n, m: (m, n))
            dim_sem = ("parallel", "arbitrary")   # vocab parallel: megacore shards the weight
        else:
            grid = (gm, gn)
            in_specs = [
                pl.BlockSpec((tm_sel, H_eff), lambda m, n: (m, 0)),  # constant over inner sweep
                pl.BlockSpec((tn_sel, H_eff), lambda m, n: (n, 0)),
                pl.BlockSpec((1, tn_sel), lambda m, n: (0, n)),
            ]
            out_specs = pl.BlockSpec((tm_sel, tn_sel), lambda m, n: (m, n))
            dim_sem = ("arbitrary", "parallel")
        kernel = _clm_head_kernel_2d
        scratch = []
        need = _vmem_need_2d(tm_sel, tn_sel, H_eff, xb, wb, ob, bb)
    else:
        gk = H_eff // tk_sel
        grid = (gn, gm, gk)                                   # k innermost (reduction last)
        in_specs = [
            pl.BlockSpec((tm_sel, tk_sel), lambda n, m, k: (m, k)),
            pl.BlockSpec((tn_sel, tk_sel), lambda n, m, k: (n, k)),
            pl.BlockSpec((1, tn_sel), lambda n, m, k: (0, n)),
        ]
        out_specs = pl.BlockSpec((tm_sel, tn_sel), lambda n, m, k: (m, n))
        dim_sem = ("parallel", "arbitrary", "arbitrary")
        kernel = _clm_head_kernel_3d
        scratch = [pltpu.VMEM((tm_sel, tn_sel), jnp.float32)]
        need = _vmem_need_3d(tm_sel, tn_sel, tk_sel, xb, wb, ob, bb)

    # Explicit scoped-VMEM limit: at least the tile footprint + headroom, never
    # above ~7/8 of the detected physical capacity (safe on v5e/v6e/v7x alike).
    vmem_limit = int(min(max(need + (4 << 20), 32 << 20), (cap * 7) // 8))

    cost = pl.CostEstimate(
        flops=2 * M * V * H,
        transcendentals=0,
        bytes_accessed=M * H * xb + V * H * wb + V * bb + M * V * ob,
    )

    out = pl.pallas_call(
        kernel,
        out_shape=jax.ShapeDtypeStruct((M, V), out_dtype),   # exact shape: no slice after
        grid_spec=pltpu.PrefetchScalarGridSpec(
            num_scalar_prefetch=0,
            grid=grid,
            in_specs=in_specs,
            out_specs=out_specs,
            scratch_shapes=scratch,
        ),
        compiler_params=pltpu.CompilerParams(
            dimension_semantics=dim_sem,
            vmem_limit_bytes=vmem_limit,
        ),
        cost_estimate=cost,
    )(x2d, w, b2d)

    return out.reshape(B, S, V)


# ---------------------------------------------------------------------------
# Self-test
# ---------------------------------------------------------------------------
if __name__ == "__main__":
    # Small config consistent with the module: hidden_size=32, vocab_size=256.
    B, S, H, V = 2, 8, 32, 256

    key = jax.random.PRNGKey(0)
    k_x, k_w, k_b = jax.random.split(key, 3)

    hidden_states = jax.random.normal(k_x, (B, S, H), dtype=jnp.float32)
    weight = jax.random.normal(k_w, (V, H), dtype=jnp.float32) * 0.02
    bias = jax.random.normal(k_b, (V,), dtype=jnp.float32) * 0.02

    ref = hidden_states @ weight.T + bias

    # Primary path: full-H reduction (2-D grid, no accumulator scratch), f32.
    out = jax.block_until_ready(cocolm_clm_head(hidden_states, weight, bias))
    assert out.shape == (B, S, V)
    assert jnp.allclose(out, ref, atol=1e-4, rtol=1e-4)

    # Caller-stored bf16 weight (streaming dtype), f32 accumulation (looser tol).
    w_bf16 = weight.astype(jnp.bfloat16)
    out_bf16 = jax.block_until_ready(cocolm_clm_head(hidden_states, w_bf16, bias))
    assert out_bf16.shape == (B, S, V)
    assert jnp.allclose(out_bf16, ref, atol=5e-2, rtol=5e-2)

    # Tiled-reduction fallback (3-D grid, VMEM accumulator) + rows not multiple of 8.
    B2, S2, H2, V2 = 2, 5, 256, 384
    k2 = jax.random.split(jax.random.PRNGKey(1), 3)
    hs2 = jax.random.normal(k2[0], (B2, S2, H2), dtype=jnp.float32)
    w2 = jax.random.normal(k2[1], (V2, H2), dtype=jnp.float32) * 0.02
    b2 = jax.random.normal(k2[2], (V2,), dtype=jnp.float32) * 0.02
    out2 = jax.block_until_ready(cocolm_clm_head(hs2, w2, b2, tk=128))
    ref2 = hs2 @ w2.T + b2
    assert out2.shape == (B2, S2, V2)
    assert jnp.allclose(out2, ref2, atol=1e-4, rtol=1e-4)

    # Ragged vocab (V not a multiple of tn): no weight pad, masked edge blocks.
    B3, S3, H3, V3 = 2, 8, 64, 900
    k3 = jax.random.split(jax.random.PRNGKey(2), 3)
    hs3 = jax.random.normal(k3[0], (B3, S3, H3), dtype=jnp.float32)
    w3 = jax.random.normal(k3[1], (V3, H3), dtype=jnp.float32) * 0.02
    b3 = jax.random.normal(k3[2], (V3,), dtype=jnp.float32) * 0.02
    out3 = jax.block_until_ready(cocolm_clm_head(hs3, w3, b3, tn=512))
    ref3 = hs3 @ w3.T + b3
    assert out3.shape == (B3, S3, V3)
    assert jnp.allclose(out3, ref3, atol=1e-4, rtol=1e-4)

    print("KERNEL_OK")
</pallas_src>

<mosaic_0001>
module attributes {stable_mosaic.version = 11 : i64} {
  func.func @_clm_head_kernel_2d(%arg0: i32, %arg1: i32, %arg2: memref<16x32xf32, #tpu.memory_space<vmem>>, %arg3: memref<256x32xf32, #tpu.memory_space<vmem>>, %arg4: memref<1x256xf32, #tpu.memory_space<vmem>>, %arg5: memref<16x256xf32, #tpu.memory_space<vmem>>) attributes {dimension_semantics = [#tpu.dimension_semantics<parallel>, #tpu.dimension_semantics<arbitrary>], iteration_bounds = array<i64: 1, 1>, scalar_prefetch = 0 : i64, scratch_operands = 0 : i64, tpu.core_type = #tpu.core_type<tc>, window_params = [{transform_indices = @transform_0, window_bounds = array<i64: 16, 32>}, {transform_indices = @transform_1, window_bounds = array<i64: 256, 32>}, {transform_indices = @transform_2, window_bounds = array<i64: 1, 256>}, {transform_indices = @transform_3, window_bounds = array<i64: 16, 256>}]} {
    %c0 = arith.constant 0 : index
    %c0_0 = arith.constant 0 : index
    %0 = vector.load %arg2[%c0, %c0_0] : memref<16x32xf32, #tpu.memory_space<vmem>>, vector<16x32xf32>
    %c0_1 = arith.constant 0 : index
    %c0_2 = arith.constant 0 : index
    %1 = vector.load %arg3[%c0_1, %c0_2] : memref<256x32xf32, #tpu.memory_space<vmem>>, vector<256x32xf32>
    %cst = arith.constant dense<0.000000e+00> : vector<16x256xf32>
    %2 = tpu.matmul %0, %1, %cst {dimension_numbers = #tpu.dot_dimension_numbers<[1], [1], [0], [0], [0, 0, 1, 0], [], []>} : vector<16x32xf32>, vector<256x32xf32>, vector<16x256xf32> -> vector<16x256xf32>
    %c0_3 = arith.constant 0 : index
    %c0_4 = arith.constant 0 : index
    %3 = vector.load %arg4[%c0_3, %c0_4] : memref<1x256xf32, #tpu.memory_space<vmem>>, vector<1x256xf32>
    %4 = vector.broadcast %3 : vector<1x256xf32> to vector<16x256xf32>
    %5 = arith.addf %2, %4 : vector<16x256xf32>
    %c0_5 = arith.constant 0 : index
    %c0_6 = arith.constant 0 : index
    %6 = vector.load %arg5[%c0_5, %c0_6] : memref<16x256xf32, #tpu.memory_space<vmem>>, vector<16x256xf32>
    tpu.vector_store %arg5[%c0_5, %c0_6], %5 {strides = array<i32>} : memref<16x256xf32, #tpu.memory_space<vmem>>, vector<16x256xf32>,
    return
  }
  func.func @transform_0(%arg0: i32, %arg1: i32) -> (i32, i32) {
    %c0_i32 = arith.constant 0 : i32
    %c0_i32_0 = arith.constant 0 : i32
    return %arg1, %c0_i32 : i32, i32
  }
  func.func @transform_1(%arg0: i32, %arg1: i32) -> (i32, i32) {
    %c0_i32 = arith.constant 0 : i32
    %c0_i32_0 = arith.constant 0 : i32
    return %arg0, %c0_i32 : i32, i32
  }
  func.func @transform_2(%arg0: i32, %arg1: i32) -> (i32, i32) {
    %c0_i32 = arith.constant 0 : i32
    %c0_i32_0 = arith.constant 0 : i32
    return %c0_i32, %arg0 : i32, i32
  }
  func.func @transform_3(%arg0: i32, %arg1: i32) -> (i32, i32) {
    %c0_i32 = arith.constant 0 : i32
    return %arg1, %arg0 : i32, i32
  }
}

</mosaic_0001>

<llo_original>
// kernel: tpu_custom_call.1
$region0: #{tpu_custom_call.1}
  #allocation0 [shape = 'u32[]', space=smem, size = 0x4, offset = 0x4, fixed_abs, tag = 'smem constant byte address 0x4 - core index']
  #allocation1 [shape = 'u32[144,128]{1,0:T(1,128)}', space=vmem, size = 0x12000, scoped, tag = 'internal scratch']
  %s0 = inlined_call_operand.vmem [shape: f32[16,32], index: 0, kind: input, shape index: {}]
  %s1 = inlined_call_operand.vmem [shape: f32[256,32], index: 1, kind: input, shape index: {}]
  %s2 = inlined_call_operand.vmem [shape: f32[1,256], index: 2, kind: input, shape index: {}]
  %s3 = inlined_call_operand.hbm [shape: f32[16,256], index: 3, kind: output, shape index: {}]
  %s4 = sld [smem:[#allocation0]]
  $region22: #{tpu_custom_call.1} parent=0
    _
  %s6 = ssub.s32 1, %s4
  %s7 = scalar_select 0, %s6, %s4
  $region1: #{tpu_custom_call.1} parent=0
    #allocation2 [shape = 'u8[16384]{0}', space=vmem, size = 0x4000, scoped, tag = 'output window, operand 0, single buffered']
    #allocation3 [shape = 's32[1]{0}', space=sflag, size = 0x4, scoped, tag = 'scoped memory for tpu_custom_call.1']
    %8 = vsyncpa [#allocation3], 0
    // Predicated region
    $region2: #{tpu_custom_call.1} parent=1 // pred_check
      _
    $region3: #{tpu_custom_call.1} parent=1 // pred_check_branch
      %10 = sbr.rel (0) target = $region5
    $region4: #{tpu_custom_call.1} parent=1 // pred_region
      _
    $region5: #{tpu_custom_call.1} parent=1 // pred_fallthru
      _
    // Predicated region
    $region6: #{tpu_custom_call.1} parent=1 // pred_check
      _
    $region7: #{tpu_custom_call.1} parent=1 // pred_check_branch
      %12 = sbr.rel (0) target = $region9
    $region8: #{tpu_custom_call.1} parent=1 // pred_region
      _
    $region9: #{tpu_custom_call.1} parent=1 // pred_fallthru
      _
    // Predicated region
    $region10: #{tpu_custom_call.1} parent=1 // pred_check
      _
    $region11: #{tpu_custom_call.1} parent=1 // pred_check_branch
      %14 = sbr.rel (0) target = $region13
    $region12: #{tpu_custom_call.1} parent=1 // pred_region
      _
    $region13: #{tpu_custom_call.1} parent=1 // pred_fallthru
      _
    %v15 = vld [vmem:[%s0] sm:$0xff]
    %v16 = vld [vmem:[%s0 + $0x8] sm:$0xff]
    %v17 = vld [vmem:[%s1] sm:$0xff]
    %v18 = vld [vmem:[%s1 + $0x8] sm:$0xff]
    %v19 = vld [vmem:[%s1 + $0x10] sm:$0xff]
    %v20 = vld [vmem:[%s1 + $0x18] sm:$0xff]
    %v21 = vld [vmem:[%s1 + $0x20] sm:$0xff]
    %v22 = vld [vmem:[%s1 + $0x28] sm:$0xff]
    %v23 = vld [vmem:[%s1 + $0x30] sm:$0xff]
    %v24 = vld [vmem:[%s1 + $0x38] sm:$0xff]
    %v25 = vld [vmem:[%s1 + $0x40] sm:$0xff]
    %v26 = vld [vmem:[%s1 + $0x48] sm:$0xff]
    %v27 = vld [vmem:[%s1 + $0x50] sm:$0xff]
    %v28 = vld [vmem:[%s1 + $0x58] sm:$0xff]
    %v29 = vld [vmem:[%s1 + $0x60] sm:$0xff]
    %v30 = vld [vmem:[%s1 + $0x68] sm:$0xff]
    %v31 = vld [vmem:[%s1 + $0x70] sm:$0xff]
    %v32 = vld [vmem:[%s1 + $0x78] sm:$0xff]
    %v33 = vld [vmem:[%s1 + $0x80] sm:$0xff]
    %v34 = vld [vmem:[%s1 + $0x88] sm:$0xff]
    %v35 = vld [vmem:[%s1 + $0x90] sm:$0xff]
    %v36 = vld [vmem:[%s1 + $0x98] sm:$0xff]
    %v37 = vld [vmem:[%s1 + $0xa0] sm:$0xff]
    %v38 = vld [vmem:[%s1 + $0xa8] sm:$0xff]
    %v39 = vld [vmem:[%s1 + $0xb0] sm:$0xff]
    %v40 = vld [vmem:[%s1 + $0xb8] sm:$0xff]
    %v41 = vld [vmem:[%s1 + $0xc0] sm:$0xff]
    %v42 = vld [vmem:[%s1 + $0xc8] sm:$0xff]
    %v43 = vld [vmem:[%s1 + $0xd0] sm:$0xff]
    %v44 = vld [vmem:[%s1 + $0xd8] sm:$0xff]
    %v45 = vld [vmem:[%s1 + $0xe0] sm:$0xff]
    %v46 = vld [vmem:[%s1 + $0xe8] sm:$0xff]
    %v47 = vld [vmem:[%s1 + $0xf0] sm:$0xff]
    %v48 = vld [vmem:[%s1 + $0xf8] sm:$0xff]
    %v49 = vld [vmem:[%s2] sm:$0x3]
    %v51 = vlaneseq
    %v52 = vshrl.u32 %v51, 7
    %v53 = vsub.s32 0, %v52
    %v54 = vrot.slane %v49, %v53
    %v55 = vlaneseq
    %v56 = vshrl.u32 %v55, 7
    %v57 = vsub.s32 1, %v56
    %v58 = vrot.slane %v49, %v57
    %vm61 = vcmask 261120
    %v63 = vsel %vm61, %v15, 0
    %v66 = vsel %vm61, %v16, 0
    %v69 = vsel %vm61, %v17, 0
    %v72 = vsel %vm61, %v18, 0
    %v75 = vsel %vm61, %v19, 0
    %v78 = vsel %vm61, %v20, 0
    %v81 = vsel %vm61, %v21, 0
    %v84 = vsel %vm61, %v22, 0
    %v87 = vsel %vm61, %v23, 0
    %v90 = vsel %vm61, %v24, 0
    %v93 = vsel %vm61, %v25, 0
    %v96 = vsel %vm61, %v26, 0
    %v99 = vsel %vm61, %v27, 0
    %v102 = vsel %vm61, %v28, 0
    %v105 = vsel %vm61, %v29, 0
    %v108 = vsel %vm61, %v30, 0
    %v111 = vsel %vm61, %v31, 0
    %v114 = vsel %vm61, %v32, 0
    %v117 = vsel %vm61, %v33, 0
    %v120 = vsel %vm61, %v34, 0
    %v123 = vsel %vm61, %v35, 0
    %v126 = vsel %vm61, %v36, 0
    %v129 = vsel %vm61, %v37, 0
    %v132 = vsel %vm61, %v38, 0
    %v135 = vsel %vm61, %v39, 0
    %v138 = vsel %vm61, %v40, 0
    %v141 = vsel %vm61, %v41, 0
    %v144 = vsel %vm61, %v42, 0
    %v147 = vsel %vm61, %v43, 0
    %v150 = vsel %vm61, %v44, 0
    %v153 = vsel %vm61, %v45, 0
    %v156 = vsel %vm61, %v46, 0
    %v159 = vsel %vm61, %v47, 0
    %v162 = vsel %vm61, %v48, 0
    %164 = vmatprep.subr.mxu0 0.0
    %165 = vmatpush1.xpose.msra.mxu0 %v69
    %166 = vmatprep.subr.mxu0 0.0
    %167 = vmatpush1.xpose.msra.mxu0 %v72
    %168 = vmatprep.subr.mxu0 0.0
    %169 = vmatpush1.xpose.msra.mxu0 %v75
    %170 = vmatprep.subr.mxu0 0.0
    %171 = vmatpush1.xpose.msra.mxu0 %v78
    %172 = vmatprep.subr.mxu0 0.0
    %173 = vmatpush1.xpose.msra.mxu0 %v81
    %174 = vmatprep.subr.mxu0 0.0
    %175 = vmatpush1.xpose.msra.mxu0 %v84
    %176 = vmatprep.subr.mxu0 0.0
    %177 = vmatpush1.xpose.msra.mxu0 %v87
    %178 = vmatprep.subr.mxu0 0.0
    %179 = vmatpush1.xpose.msra.mxu0 %v90
    %180 = vmatprep.subr.mxu0 0.0
    %181 = vmatpush1.xpose.msra.mxu0 %v93
    %182 = vmatprep.subr.mxu0 0.0
    %183 = vmatpush1.xpose.msra.mxu0 %v96
    %184 = vmatprep.subr.mxu0 0.0
    %185 = vmatpush1.xpose.msra.mxu0 %v99
    %186 = vmatprep.subr.mxu0 0.0
    %187 = vmatpush1.xpose.msra.mxu0 %v102
    %188 = vmatprep.subr.mxu0 0.0
    %189 = vmatpush1.xpose.msra.mxu0 %v105
    %190 = vmatprep.subr.mxu0 0.0
    %191 = vmatpush1.xpose.msra.mxu0 %v108
    %192 = vmatprep.subr.mxu0 0.0
    %193 = vmatpush1.xpose.msra.mxu0 %v111
    %194 = vmatprep.subr.mxu0 0.0
    %195 = vmatpush1.xpose.msra.mxu0 %v114
    %196 = vmatprep.subr.mxu0 0.0
    %197 = vmatpush1.xpose.msra.mxu0 %v117
    %198 = vmatprep.subr.mxu0 0.0
    %199 = vmatpush1.xpose.msra.mxu0 %v120
    %200 = vmatprep.subr.mxu0 0.0
    %201 = vmatpush1.xpose.msra.mxu0 %v123
    %202 = vmatprep.subr.mxu0 0.0
    %203 = vmatpush1.xpose.msra.mxu0 %v126
    %204 = vmatprep.subr.mxu0 0.0
    %205 = vmatpush1.xpose.msra.mxu0 %v129
    %206 = vmatprep.subr.mxu0 0.0
    %207 = vmatpush1.xpose.msra.mxu0 %v132
    %208 = vmatprep.subr.mxu0 0.0
    %209 = vmatpush1.xpose.msra.mxu0 %v135
    %210 = vmatprep.subr.mxu0 0.0
    %211 = vmatpush1.xpose.msra.mxu0 %v138
    %212 = vmatprep.subr.mxu0 0.0
    %213 = vmatpush1.xpose.msra.mxu0 %v141
    %214 = vmatprep.subr.mxu0 0.0
    %215 = vmatpush1.xpose.msra.mxu0 %v144
    %216 = vmatprep.subr.mxu0 0.0
    %217 = vmatpush1.xpose.msra.mxu0 %v147
    %218 = vmatprep.subr.mxu0 0.0
    %219 = vmatpush1.xpose.msra.mxu0 %v150
    %220 = vmatprep.subr.mxu0 0.0
    %221 = vmatpush1.xpose.msra.mxu0 %v153
    %222 = vmatprep.subr.mxu0 0.0
    %223 = vmatpush1.xpose.msra.mxu0 %v156
    %224 = vmatprep.subr.mxu0 0.0
    %225 = vmatpush1.xpose.msra.mxu0 %v159
    %226 = vmatprep.subr.mxu0 0.0
    %227 = vmatpush1.xpose.msra.mxu0 %v162
    %228 = vmatprep.mubr.f32.mxu0 0.0
    %229 = vmatmul.mubr.f32.gmra.mrb[0].mxu0 %v63
    %v230 = vpop.f32.mrb[0].mxu0
    %v231 = vadd.f32 %v54, %v230
    %v232 = vpop.f32.mrb[0].mxu0
    %v233 = vadd.f32 %v58, %v232
    %234 = vmatprep.mubr.f32.mxu0 0.0
    %235 = vmatmul.mubr.f32.gmra.mrb[0].mxu0 %v66
    %v236 = vpop.f32.mrb[0].mxu0
    %v237 = vadd.f32 %v54, %v236
    %v238 = vpop.f32.mrb[0].mxu0
    %v239 = vadd.f32 %v58, %v238
    %240 = vdwg.mxu0
    %241 = vst [vmem:[#allocation2] sm:$0xff] %v231
    %242 = vst [vmem:[#allocation2 + $0x8] sm:$0xff] %v233
    %243 = vst [vmem:[#allocation2 + $0x10] sm:$0xff] %v237
    %244 = vst [vmem:[#allocation2 + $0x18] sm:$0xff] %v239
    // Predicated region
    $region14: #{tpu_custom_call.1} parent=1 // pred_check
      _
    $region15: #{tpu_custom_call.1} parent=1 // pred_check_branch
      %246 = sbr.rel (0) target = $region17
    $region16: #{tpu_custom_call.1} parent=1 // pred_region
      %s248 = ssub.s32 512, 512
      %249 = vsyncadd [#allocation3], %s248
      %s250 = sshll.u32 [#allocation2], 4
      %s251 = int_to_ptr.vmem [resolvable:$true] %s250
      %256 = dma.vmem_to_hbm [thread:$0]  %s251, 512, %s3, [#allocation3], 256, 256, 16
    $region17: #{tpu_custom_call.1} parent=1 // pred_fallthru
      _
    // Predicated region
    $region18: #{tpu_custom_call.1} parent=1 // pred_check
      _
    $region19: #{tpu_custom_call.1} parent=1 // pred_check_branch
      %258 = sbr.rel (0) target = $region21
    $region20: #{tpu_custom_call.1} parent=1 // pred_region
      %259 = dma.done [#allocation3], 512
    $region21: #{tpu_custom_call.1} parent=1 // pred_fallthru
      _
    %260 = vsyncpa [#allocation3], 1

</llo_original>
